<compile_context>
chip_gen: v6e
topology: v6e:2x2x1
jax: 0.10.0
libtpu: 0.0.40
codegen_flags: <defaults>
</compile_context>

<pallas_src>
import jax
import jax.numpy as jnp
from jax.experimental import pallas as pl
from jax.experimental.pallas import tpu as pltpu


# ----------------------------- Pallas kernel --------------------------------

def _fused_gcn_kernel(adj_ref, x_ref, w1_ref, b1_ref, w2_ref, b2_ref,
                      h2_ref, h1_ref):
    adj = adj_ref[...]                                    # bf16 [Np, Np]

    # ---- layer 1: h1 = relu(A_hat @ (X @ W1) + b1) --------------------------
    xw1 = jnp.dot(x_ref[...], w1_ref[...],
                  preferred_element_type=jnp.float32)     # MXU, bf16 in / f32 acc
    agg1 = jnp.dot(adj, xw1.astype(jnp.bfloat16),
                   preferred_element_type=jnp.float32)    # MXU
    h1 = jnp.maximum(agg1 + b1_ref[...], 0.0)             # f32 VPU epilogue
    h1_ref[...] = h1.astype(h1_ref.dtype)

    # ---- layer 2: h2 = A_hat @ (h1 @ W2) + b2  (h1 never leaves the chip) ---
    xw2 = jnp.dot(h1.astype(jnp.bfloat16), w2_ref[...],
                  preferred_element_type=jnp.float32)
    agg2 = jnp.dot(adj, xw2.astype(jnp.bfloat16),
                   preferred_element_type=jnp.float32)
    h2_ref[...] = (agg2 + b2_ref[...]).astype(h2_ref.dtype)


def fused_gcn_pallas(adj, x, w1, b1, w2, b2):
    """Fused 2-layer GCN forward.

    adj: [Np, Np] bf16, x: [Np, Fin] bf16, w1: [Fin, H] bf16, b1: [1, H] f32,
    w2: [H, Fout] bf16, b2: [1, Fout] f32.  All dims padded to multiples of
    128 by the caller.  Returns (h2 [Np, Fout] f32, h1 [Np, H] f32).
    """
    n_pad = adj.shape[0]
    f_in = x.shape[1]
    hid = w1.shape[1]
    out = w2.shape[1]

    flops = 2 * (n_pad * f_in * hid + n_pad * n_pad * hid
                 + n_pad * hid * out + n_pad * n_pad * out)
    bytes_accessed = ((adj.size + x.size + w1.size + w2.size) * 2   # bf16 in
                      + (b1.size + b2.size) * 4                     # f32 in
                      + n_pad * (hid + out) * 4)                    # f32 out

    return pl.pallas_call(
        _fused_gcn_kernel,
        out_shape=(jax.ShapeDtypeStruct((n_pad, out), jnp.float32),   # h2
                   jax.ShapeDtypeStruct((n_pad, hid), jnp.float32)),  # h1
        grid=(1,),
        in_specs=[
            pl.BlockSpec((n_pad, n_pad), lambda i: (0, 0)),   # adj
            pl.BlockSpec((n_pad, f_in), lambda i: (0, 0)),    # x
            pl.BlockSpec((f_in, hid), lambda i: (0, 0)),      # w1
            pl.BlockSpec((1, hid), lambda i: (0, 0)),         # b1
            pl.BlockSpec((hid, out), lambda i: (0, 0)),       # w2
            pl.BlockSpec((1, out), lambda i: (0, 0)),         # b2
        ],
        out_specs=(pl.BlockSpec((n_pad, out), lambda i: (0, 0)),
                   pl.BlockSpec((n_pad, hid), lambda i: (0, 0))),
        compiler_params=pltpu.CompilerParams(
            dimension_semantics=("arbitrary",),
            vmem_limit_bytes=32 * 1024 * 1024),   # fits v7x 64 MiB physical VMEM
        cost_estimate=pl.CostEstimate(
            flops=flops, transcendentals=0, bytes_accessed=bytes_accessed),
    )(adj, x, w1, b1, w2, b2)


# ------------------------------- glue (JAX) ----------------------------------

def normalized_adjacency(edge_index, num_nodes):
    """A_hat = D^-1/2 (A + I) D^-1/2, matching GCNConv default normalization.

    Note: duplicate edges are deduplicated (simple-graph assumption).
    """
    src, dst = edge_index[0], edge_index[1]
    a = jnp.zeros((num_nodes, num_nodes), jnp.float32)
    a = a.at[dst, src].set(1.0)                          # message src -> dst
    a = a + jnp.eye(num_nodes, dtype=jnp.float32)        # add self-loops
    deg = a.sum(axis=1)
    d_inv_sqrt = jnp.where(deg > 0, 1.0 / jnp.sqrt(deg), 0.0)
    return d_inv_sqrt[:, None] * a * d_inv_sqrt[None, :]


def _pad2d(x, rows, cols):
    return jnp.pad(x, ((0, rows - x.shape[0]), (0, cols - x.shape[1])))


def _round_up(v, m):
    return ((v + m - 1) // m) * m


class SimpleGCNPallas:
    """2-layer GCN: h1 = relu(GCNConv1(x)); h2 = GCNConv2(h1); returns (h2, h1)."""

    def __init__(self, input_dim, hidden_dim, output_dim, key):
        k1, k2 = jax.random.split(key, 2)
        # Glorot-uniform weights, zero bias (GCNConv defaults), deterministic.
        lim1 = jnp.sqrt(6.0 / (input_dim + hidden_dim))
        lim2 = jnp.sqrt(6.0 / (hidden_dim + output_dim))
        self.w1 = jax.random.uniform(k1, (input_dim, hidden_dim),
                                     jnp.float32, -lim1, lim1)
        self.w2 = jax.random.uniform(k2, (hidden_dim, output_dim),
                                     jnp.float32, -lim2, lim2)
        self.b1 = jnp.zeros((1, hidden_dim), jnp.float32)
        self.b2 = jnp.zeros((1, output_dim), jnp.float32)
        self.dims = (input_dim, hidden_dim, output_dim)

    def __call__(self, x, edge_index):
        n = x.shape[0]
        in_d, hid_d, out_d = self.dims
        adj = normalized_adjacency(edge_index, n)

        # Lane-dense padding: every matmul dimension is a multiple of 128 so
        # adjacency loads / output stores are unmasked and the MXU is fully
        # fed.  (256-alignment on v6e/v7x is only worthwhile once N > 128.)
        # TODO(synk): for large graphs (N >> 1K) switch to a row-tiled,
        # pipelined grid (layer-1 pass then layer-2 pass) instead of
        # whole-array blocks, with per-generation tile budgets.
        n_pad = _round_up(n, 128)
        in_pad = _round_up(in_d, 128)
        hid_pad = _round_up(hid_d, 128)
        out_pad = _round_up(out_d, 128)

        # bf16 MXU inputs (halves HBM/VMEM bytes for the O(N^2) adjacency),
        # f32 biases for the f32 epilogue.
        adj_p = _pad2d(adj, n_pad, n_pad).astype(jnp.bfloat16)
        x_p = _pad2d(x, n_pad, in_pad).astype(jnp.bfloat16)
        w1_p = _pad2d(self.w1, in_pad, hid_pad).astype(jnp.bfloat16)
        w2_p = _pad2d(self.w2, hid_pad, out_pad).astype(jnp.bfloat16)
        b1_p = _pad2d(self.b1, 1, hid_pad)
        b2_p = _pad2d(self.b2, 1, out_pad)

        h2_p, h1_p = fused_gcn_pallas(adj_p, x_p, w1_p, b1_p, w2_p, b2_p)

        h1 = h1_p[:n, :hid_d]
        h2 = h2_p[:n, :out_d]
        return h2, h1


# --------------------------------- main --------------------------------------

if __name__ == "__main__":
    key = jax.random.PRNGKey(0)
    k_graph_s, k_graph_d, k_model = jax.random.split(key, 3)

    # Karate-club-like sizes: 34 nodes, identity features, hidden=32, classes=4.
    num_nodes = 34
    input_dim, hidden_dim, output_dim = num_nodes, 32, 4

    # Deterministic synthetic undirected graph (no self-loops in edge list).
    num_rand_edges = 60
    src = jax.random.randint(k_graph_s, (num_rand_edges,), 0, num_nodes)
    dst = jax.random.randint(k_graph_d, (num_rand_edges,), 0, num_nodes)
    dst = jnp.where(dst == src, (dst + 1) % num_nodes, dst)
    edge_index = jnp.stack([jnp.concatenate([src, dst]),
                            jnp.concatenate([dst, src])]).astype(jnp.int32)

    # Node features: identity matrix (standard Karate Club featurization).
    x = jnp.eye(num_nodes, dtype=jnp.float32)

    model = SimpleGCNPallas(input_dim, hidden_dim, output_dim, k_model)
    h2, h1 = model(x, edge_index)
    jax.block_until_ready((h2, h1))

    # Pure-JAX f32 reference for correctness (kernel uses bf16 MXU inputs,
    # f32 accumulation -> compare with a loosened tolerance).
    adj = normalized_adjacency(edge_index, num_nodes)
    h1_ref = jnp.maximum(adj @ (x @ model.w1) + model.b1, 0.0)
    h2_ref = adj @ (h1_ref @ model.w2) + model.b2

    assert h1.shape == (num_nodes, hidden_dim)
    assert h2.shape == (num_nodes, output_dim)
    assert jnp.allclose(h1, h1_ref, atol=2e-2, rtol=2e-2), \
        float(jnp.max(jnp.abs(h1 - h1_ref)))
    assert jnp.allclose(h2, h2_ref, atol=2e-2, rtol=2e-2), \
        float(jnp.max(jnp.abs(h2 - h2_ref)))

    print("KERNEL_OK")
</pallas_src>

<mosaic_0001>
module attributes {stable_mosaic.version = 11 : i64} {
  func.func @_fused_gcn_kernel(%arg0: i32, %arg1: memref<128x128xbf16, #tpu.memory_space<vmem>>, %arg2: memref<128x128xbf16, #tpu.memory_space<vmem>>, %arg3: memref<128x128xbf16, #tpu.memory_space<vmem>>, %arg4: memref<1x128xf32, #tpu.memory_space<vmem>>, %arg5: memref<128x128xbf16, #tpu.memory_space<vmem>>, %arg6: memref<1x128xf32, #tpu.memory_space<vmem>>, %arg7: memref<128x128xf32, #tpu.memory_space<vmem>>, %arg8: memref<128x128xf32, #tpu.memory_space<vmem>>) attributes {dimension_semantics = [#tpu.dimension_semantics<arbitrary>], iteration_bounds = array<i64: 1>, scalar_prefetch = 0 : i64, scratch_operands = 0 : i64, tpu.core_type = #tpu.core_type<tc>, window_params = [{pipeline_mode = #tpu.pipeline_mode<synchronous>, transform_indices = @transform_0, window_bounds = array<i64: 128, 128>}, {pipeline_mode = #tpu.pipeline_mode<synchronous>, transform_indices = @transform_1, window_bounds = array<i64: 128, 128>}, {pipeline_mode = #tpu.pipeline_mode<synchronous>, transform_indices = @transform_2, window_bounds = array<i64: 128, 128>}, {pipeline_mode = #tpu.pipeline_mode<synchronous>, transform_indices = @transform_3, window_bounds = array<i64: 1, 128>}, {pipeline_mode = #tpu.pipeline_mode<synchronous>, transform_indices = @transform_4, window_bounds = array<i64: 128, 128>}, {pipeline_mode = #tpu.pipeline_mode<synchronous>, transform_indices = @transform_5, window_bounds = array<i64: 1, 128>}, {pipeline_mode = #tpu.pipeline_mode<synchronous>, transform_indices = @transform_6, window_bounds = array<i64: 128, 128>}, {pipeline_mode = #tpu.pipeline_mode<synchronous>, transform_indices = @transform_7, window_bounds = array<i64: 128, 128>}]} {
    %c0 = arith.constant 0 : index
    %c0_0 = arith.constant 0 : index
    %0 = vector.load %arg1[%c0, %c0_0] : memref<128x128xbf16, #tpu.memory_space<vmem>>, vector<128x128xbf16>
    %c0_1 = arith.constant 0 : index
    %c0_2 = arith.constant 0 : index
    %1 = vector.load %arg2[%c0_1, %c0_2] : memref<128x128xbf16, #tpu.memory_space<vmem>>, vector<128x128xbf16>
    %c0_3 = arith.constant 0 : index
    %c0_4 = arith.constant 0 : index
    %2 = vector.load %arg3[%c0_3, %c0_4] : memref<128x128xbf16, #tpu.memory_space<vmem>>, vector<128x128xbf16>
    %cst = arith.constant dense<0.000000e+00> : vector<128x128xf32>
    %3 = tpu.matmul %1, %2, %cst {dimension_numbers = #tpu.dot_dimension_numbers<[1], [0], [0], [1], [0, 0, 1, 1], [], []>} : vector<128x128xbf16>, vector<128x128xbf16>, vector<128x128xf32> -> vector<128x128xf32>
    %4 = arith.truncf %3 : vector<128x128xf32> to vector<128x128xbf16>
    %cst_5 = arith.constant dense<0.000000e+00> : vector<128x128xf32>
    %5 = tpu.matmul %0, %4, %cst_5 {dimension_numbers = #tpu.dot_dimension_numbers<[1], [0], [0], [1], [0, 0, 1, 1], [], []>} : vector<128x128xbf16>, vector<128x128xbf16>, vector<128x128xf32> -> vector<128x128xf32>
    %c0_6 = arith.constant 0 : index
    %c0_7 = arith.constant 0 : index
    %6 = vector.load %arg4[%c0_6, %c0_7] : memref<1x128xf32, #tpu.memory_space<vmem>>, vector<1x128xf32>
    %7 = vector.broadcast %6 : vector<1x128xf32> to vector<128x128xf32>
    %8 = arith.addf %5, %7 : vector<128x128xf32>
    %cst_8 = arith.constant 0.000000e+00 : f32
    %9 = vector.broadcast %cst_8 : f32 to vector<128x128xf32>
    %10 = arith.maximumf %8, %9 : vector<128x128xf32>
    %c0_9 = arith.constant 0 : index
    %c0_10 = arith.constant 0 : index
    %11 = vector.load %arg8[%c0_9, %c0_10] : memref<128x128xf32, #tpu.memory_space<vmem>>, vector<128x128xf32>
    tpu.vector_store %arg8[%c0_9, %c0_10], %10 {strides = array<i32>} : memref<128x128xf32, #tpu.memory_space<vmem>>, vector<128x128xf32>,
    %12 = arith.truncf %10 : vector<128x128xf32> to vector<128x128xbf16>
    %c0_11 = arith.constant 0 : index
    %c0_12 = arith.constant 0 : index
    %13 = vector.load %arg5[%c0_11, %c0_12] : memref<128x128xbf16, #tpu.memory_space<vmem>>, vector<128x128xbf16>
    %cst_13 = arith.constant dense<0.000000e+00> : vector<128x128xf32>
    %14 = tpu.matmul %12, %13, %cst_13 {dimension_numbers = #tpu.dot_dimension_numbers<[1], [0], [0], [1], [0, 0, 1, 1], [], []>} : vector<128x128xbf16>, vector<128x128xbf16>, vector<128x128xf32> -> vector<128x128xf32>
    %15 = arith.truncf %14 : vector<128x128xf32> to vector<128x128xbf16>
    %cst_14 = arith.constant dense<0.000000e+00> : vector<128x128xf32>
    %16 = tpu.matmul %0, %15, %cst_14 {dimension_numbers = #tpu.dot_dimension_numbers<[1], [0], [0], [1], [0, 0, 1, 1], [], []>} : vector<128x128xbf16>, vector<128x128xbf16>, vector<128x128xf32> -> vector<128x128xf32>
    %c0_15 = arith.constant 0 : index
    %c0_16 = arith.constant 0 : index
    %17 = vector.load %arg6[%c0_15, %c0_16] : memref<1x128xf32, #tpu.memory_space<vmem>>, vector<1x128xf32>
    %18 = vector.broadcast %17 : vector<1x128xf32> to vector<128x128xf32>
    %19 = arith.addf %16, %18 : vector<128x128xf32>
    %c0_17 = arith.constant 0 : index
    %c0_18 = arith.constant 0 : index
    %20 = vector.load %arg7[%c0_17, %c0_18] : memref<128x128xf32, #tpu.memory_space<vmem>>, vector<128x128xf32>
    tpu.vector_store %arg7[%c0_17, %c0_18], %19 {strides = array<i32>} : memref<128x128xf32, #tpu.memory_space<vmem>>, vector<128x128xf32>,
    return
  }
  func.func @transform_0(%arg0: i32) -> (i32, i32) {
    %c0_i32 = arith.constant 0 : i32
    %c0_i32_0 = arith.constant 0 : i32
    %c0_i32_1 = arith.constant 0 : i32
    return %c0_i32, %c0_i32_0 : i32, i32
  }
  func.func @transform_1(%arg0: i32) -> (i32, i32) {
    %c0_i32 = arith.constant 0 : i32
    %c0_i32_0 = arith.constant 0 : i32
    %c0_i32_1 = arith.constant 0 : i32
    return %c0_i32, %c0_i32_0 : i32, i32
  }
  func.func @transform_2(%arg0: i32) -> (i32, i32) {
    %c0_i32 = arith.constant 0 : i32
    %c0_i32_0 = arith.constant 0 : i32
    %c0_i32_1 = arith.constant 0 : i32
    return %c0_i32, %c0_i32_0 : i32, i32
  }
  func.func @transform_3(%arg0: i32) -> (i32, i32) {
    %c0_i32 = arith.constant 0 : i32
    %c0_i32_0 = arith.constant 0 : i32
    %c0_i32_1 = arith.constant 0 : i32
    return %c0_i32, %c0_i32_0 : i32, i32
  }
  func.func @transform_4(%arg0: i32) -> (i32, i32) {
    %c0_i32 = arith.constant 0 : i32
    %c0_i32_0 = arith.constant 0 : i32
    %c0_i32_1 = arith.constant 0 : i32
    return %c0_i32, %c0_i32_0 : i32, i32
  }
  func.func @transform_5(%arg0: i32) -> (i32, i32) {
    %c0_i32 = arith.constant 0 : i32
    %c0_i32_0 = arith.constant 0 : i32
    %c0_i32_1 = arith.constant 0 : i32
    return %c0_i32, %c0_i32_0 : i32, i32
  }
  func.func @transform_6(%arg0: i32) -> (i32, i32) {
    %c0_i32 = arith.constant 0 : i32
    %c0_i32_0 = arith.constant 0 : i32
    %c0_i32_1 = arith.constant 0 : i32
    return %c0_i32, %c0_i32_0 : i32, i32
  }
  func.func @transform_7(%arg0: i32) -> (i32, i32) {
    %c0_i32 = arith.constant 0 : i32
    %c0_i32_0 = arith.constant 0 : i32
    %c0_i32_1 = arith.constant 0 : i32
    return %c0_i32, %c0_i32_0 : i32, i32
  }
}

</mosaic_0001>

<llo_original>
// kernel: tpu_custom_call.1
$region0: #{tpu_custom_call.1}
  #allocation0 [shape = 'u32[]', space=smem, size = 0x4, offset = 0x4, fixed_abs, tag = 'smem constant byte address 0x4 - core index']
  #allocation1 [shape = 'u32[144,128]{1,0:T(1,128)}', space=vmem, size = 0x12000, scoped, tag = 'internal scratch']
  %s0 = inlined_call_operand.hbm [shape: bf16[128,128], index: 0, kind: input, shape index: {}]
  %s1 = inlined_call_operand.hbm [shape: bf16[128,128], index: 1, kind: input, shape index: {}]
  %s2 = inlined_call_operand.hbm [shape: bf16[128,128], index: 2, kind: input, shape index: {}]
  %s3 = inlined_call_operand.vmem [shape: f32[1,128], index: 3, kind: input, shape index: {}]
  %s4 = inlined_call_operand.hbm [shape: bf16[128,128], index: 4, kind: input, shape index: {}]
  %s5 = inlined_call_operand.vmem [shape: f32[1,128], index: 5, kind: input, shape index: {}]
  %s6 = inlined_call_operand.hbm [shape: f32[128,128], index: 6, kind: output, shape index: {0}]
  %s7 = inlined_call_operand.hbm [shape: f32[128,128], index: 7, kind: output, shape index: {1}]
  %8 = xla_tuple %s6, %s7
  %s9 = sld [smem:[#allocation0]]
  $region58: #{tpu_custom_call.1} parent=0
    _
  %s11 = ssub.s32 1, %s9
  %s12 = scalar_select 0, %s11, %s9
  $region1: #{tpu_custom_call.1} parent=0
    #allocation2 [shape = 'u8[32768]{0}', space=vmem, size = 0x8000, scoped, tag = 'input window, operand 0, single buffered']
    #allocation3 [shape = 's32[1]{0}', space=sflag, size = 0x4, scoped, tag = 'scoped memory for tpu_custom_call.1']
    #allocation4 [shape = 's32[1]{0}', space=sflag, size = 0x4, scoped, tag = 'scoped memory for tpu_custom_call.1']
    #allocation5 [shape = 'u8[32768]{0}', space=vmem, size = 0x8000, scoped, tag = 'input window, operand 1, single buffered']
    #allocation6 [shape = 's32[1]{0}', space=sflag, size = 0x4, scoped, tag = 'scoped memory for tpu_custom_call.1']
    #allocation7 [shape = 'u8[32768]{0}', space=vmem, size = 0x8000, scoped, tag = 'input window, operand 2, single buffered']
    #allocation8 [shape = 'u8[32768]{0}', space=vmem, size = 0x8000, scoped, tag = 'input window, operand 4, single buffered']
    #allocation9 [shape = 's32[1]{0}', space=sflag, size = 0x4, scoped, tag = 'scoped memory for tpu_custom_call.1']
    #allocation10 [shape = 'u8[65536]{0}', space=vmem, size = 0x10000, scoped, tag = 'output window, operand 0, single buffered']
    #allocation11 [shape = 'u8[65536]{0}', space=vmem, size = 0x10000, scoped, tag = 'output window, operand 1, single buffered']
    #allocation12 [shape = 's32[1]{0}', space=sflag, size = 0x4, scoped, tag = 'scoped memory for tpu_custom_call.1']
    %13 = vsyncpa [#allocation3], 0
    %14 = vsyncpa [#allocation6], 0
    %15 = vsyncpa [#allocation9], 0
    %16 = vsyncpa [#allocation4], 0
    %17 = vsyncpa [#allocation12], 0
    // Predicated region
    $region2: #{tpu_custom_call.1} parent=1 // pred_check
      _
    $region3: #{tpu_custom_call.1} parent=1 // pred_check_branch
      %19 = sbr.rel (0) target = $region5
    $region4: #{tpu_custom_call.1} parent=1 // pred_region
      %s21 = ssub.s32 1024, 1024
      %22 = vsyncadd [#allocation3], %s21
      %s23 = sshll.u32 [#allocation2], 4
      %s24 = int_to_ptr.vmem [resolvable:$true] %s23
      %29 = dma.hbm_to_vmem [thread:$0]  %s0, 1024, %s24, [#allocation3], 64, 64, 4
    $region5: #{tpu_custom_call.1} parent=1 // pred_fallthru
      _
    // Predicated region
    $region6: #{tpu_custom_call.1} parent=1 // pred_check
      _
    $region7: #{tpu_custom_call.1} parent=1 // pred_check_branch
      %31 = sbr.rel (0) target = $region9
    $region8: #{tpu_custom_call.1} parent=1 // pred_region
      %s33 = ssub.s32 1024, 1024
      %34 = vsyncadd [#allocation6], %s33
      %s35 = sshll.u32 [#allocation5], 4
      %s36 = int_to_ptr.vmem [resolvable:$true] %s35
      %41 = dma.hbm_to_vmem [thread:$0]  %s1, 1024, %s36, [#allocation6], 64, 64, 4
    $region9: #{tpu_custom_call.1} parent=1 // pred_fallthru
      _
    // Predicated region
    $region10: #{tpu_custom_call.1} parent=1 // pred_check
      _
    $region11: #{tpu_custom_call.1} parent=1 // pred_check_branch
      %43 = sbr.rel (0) target = $region13
    $region12: #{tpu_custom_call.1} parent=1 // pred_region
      %s45 = ssub.s32 1024, 1024
      %46 = vsyncadd [#allocation6], %s45
      %s47 = sshll.u32 [#allocation7], 4
      %s48 = int_to_ptr.vmem [resolvable:$true] %s47
      %53 = dma.hbm_to_vmem [thread:$0]  %s2, 1024, %s48, [#allocation6], 64, 64, 4
    $region13: #{tpu_custom_call.1} parent=1 // pred_fallthru
      _
    // Predicated region
    $region14: #{tpu_custom_call.1} parent=1 // pred_check
      _
    $region15: #{tpu_custom_call.1} parent=1 // pred_check_branch
      %55 = sbr.rel (0) target = $region17
    $region16: #{tpu_custom_call.1} parent=1 // pred_region
      _
    $region17: #{tpu_custom_call.1} parent=1 // pred_fallthru
      _
    // Predicated region
    $region18: #{tpu_custom_call.1} parent=1 // pred_check
      _
    $region19: #{tpu_custom_call.1} parent=1 // pred_check_branch
      %57 = sbr.rel (0) target = $region21
    $region20: #{tpu_custom_call.1} parent=1 // pred_region
      %s59 = ssub.s32 1024, 1024
      %60 = vsyncadd [#allocation9], %s59
      %s61 = sshll.u32 [#allocation8], 4
      %s62 = int_to_ptr.vmem [resolvable:$true] %s61
      %67 = dma.hbm_to_vmem [thread:$0]  %s4, 1024, %s62, [#allocation9], 64, 64, 4
    $region21: #{tpu_custom_call.1} parent=1 // pred_fallthru
      _
    // Predicated region
    $region22: #{tpu_custom_call.1} parent=1 // pred_check
      _
    $region23: #{tpu_custom_call.1} parent=1 // pred_check_branch
      %69 = sbr.rel (0) target = $region25
    $region24: #{tpu_custom_call.1} parent=1 // pred_region
      _
    $region25: #{tpu_custom_call.1} parent=1 // pred_fallthru
      _
    // Predicated region
    $region26: #{tpu_custom_call.1} parent=1 // pred_check
      _
    $region27: #{tpu_custom_call.1} parent=1 // pred_check_branch
      %71 = sbr.rel (0) target = $region29
    $region28: #{tpu_custom_call.1} parent=1 // pred_region
      %72 = dma.done [#allocation3], 1024
    $region29: #{tpu_custom_call.1} parent=1 // pred_fallthru
      _
    // Predicated region
    $region30: #{tpu_custom_call.1} parent=1 // pred_check
      _
    $region31: #{tpu_custom_call.1} parent=1 // pred_check_branch
      %74 = sbr.rel (0) target = $region33
    $region32: #{tpu_custom_call.1} parent=1 // pred_region
      %75 = dma.done [#allocation6], 1024
    $region33: #{tpu_custom_call.1} parent=1 // pred_fallthru
      _
    // Predicated region
    $region34: #{tpu_custom_call.1} parent=1 // pred_check
      _
    $region35: #{tpu_custom_call.1} parent=1 // pred_check_branch
      %77 = sbr.rel (0) target = $region37
    $region36: #{tpu_custom_call.1} parent=1 // pred_region
      %78 = dma.done [#allocation6], 1024
    $region37: #{tpu_custom_call.1} parent=1 // pred_fallthru
      _
    // Predicated region
    $region38: #{tpu_custom_call.1} parent=1 // pred_check
      _
    $region39: #{tpu_custom_call.1} parent=1 // pred_check_branch
      %80 = sbr.rel (0) target = $region41
    $region40: #{tpu_custom_call.1} parent=1 // pred_region
      %81 = dma.done [#allocation9], 1024
    $region41: #{tpu_custom_call.1} parent=1 // pred_fallthru
      _
    %v83 = vld [vmem:[#allocation2] sm:$0xf]
    %v84 = vld [vmem:[#allocation2 + $0x4] sm:$0xf]
    %v85 = vld [vmem:[#allocation2 + $0x8] sm:$0xf]
    %v86 = vld [vmem:[#allocation2 + $0xc] sm:$0xf]
    %v87 = vld [vmem:[#allocation2 + $0x10] sm:$0xf]
    %v88 = vld [vmem:[#allocation2 + $0x14] sm:$0xf]
    %v89 = vld [vmem:[#allocation2 + $0x18] sm:$0xf]
    %v90 = vld [vmem:[#allocation2 + $0x1c] sm:$0xf]
    %v91 = vld [vmem:[#allocation2 + $0x20] sm:$0xf]
    %v92 = vld [vmem:[#allocation2 + $0x24] sm:$0xf]
    %v93 = vld [vmem:[#allocation2 + $0x28] sm:$0xf]
    %v94 = vld [vmem:[#allocation2 + $0x2c] sm:$0xf]
    %v95 = vld [vmem:[#allocation2 + $0x30] sm:$0xf]
    %v96 = vld [vmem:[#allocation2 + $0x34] sm:$0xf]
    %v97 = vld [vmem:[#allocation2 + $0x38] sm:$0xf]
    %v98 = vld [vmem:[#allocation2 + $0x3c] sm:$0xf]
    %v99 = vld [vmem:[#allocation5] sm:$0xf]
    %v100 = vld [vmem:[#allocation5 + $0x4] sm:$0xf]
    %v101 = vld [vmem:[#allocation5 + $0x8] sm:$0xf]
    %v102 = vld [vmem:[#allocation5 + $0xc] sm:$0xf]
    %v103 = vld [vmem:[#allocation5 + $0x10] sm:$0xf]
    %v104 = vld [vmem:[#allocation5 + $0x14] sm:$0xf]
    %v105 = vld [vmem:[#allocation5 + $0x18] sm:$0xf]
    %v106 = vld [vmem:[#allocation5 + $0x1c] sm:$0xf]
    %v107 = vld [vmem:[#allocation5 + $0x20] sm:$0xf]
    %v108 = vld [vmem:[#allocation5 + $0x24] sm:$0xf]
    %v109 = vld [vmem:[#allocation5 + $0x28] sm:$0xf]
    %v110 = vld [vmem:[#allocation5 + $0x2c] sm:$0xf]
    %v111 = vld [vmem:[#allocation5 + $0x30] sm:$0xf]
    %v112 = vld [vmem:[#allocation5 + $0x34] sm:$0xf]
    %v113 = vld [vmem:[#allocation5 + $0x38] sm:$0xf]
    %v114 = vld [vmem:[#allocation5 + $0x3c] sm:$0xf]
    %v115 = vld [vmem:[#allocation7] sm:$0xf]
    %v116 = vld [vmem:[#allocation7 + $0x4] sm:$0xf]
    %v117 = vld [vmem:[#allocation7 + $0x8] sm:$0xf]
    %v118 = vld [vmem:[#allocation7 + $0xc] sm:$0xf]
    %v119 = vld [vmem:[#allocation7 + $0x10] sm:$0xf]
    %v120 = vld [vmem:[#allocation7 + $0x14] sm:$0xf]
    %v121 = vld [vmem:[#allocation7 + $0x18] sm:$0xf]
    %v122 = vld [vmem:[#allocation7 + $0x1c] sm:$0xf]
    %v123 = vld [vmem:[#allocation7 + $0x20] sm:$0xf]
    %v124 = vld [vmem:[#allocation7 + $0x24] sm:$0xf]
    %v125 = vld [vmem:[#allocation7 + $0x28] sm:$0xf]
    %v126 = vld [vmem:[#allocation7 + $0x2c] sm:$0xf]
    %v127 = vld [vmem:[#allocation7 + $0x30] sm:$0xf]
    %v128 = vld [vmem:[#allocation7 + $0x34] sm:$0xf]
    %v129 = vld [vmem:[#allocation7 + $0x38] sm:$0xf]
    %v130 = vld [vmem:[#allocation7 + $0x3c] sm:$0xf]
    %v147 = vunpack.c.l.b16 %v99
    %v148 = vunpack.c.l.b16 %v100
    %v149 = vunpack.c.l.b16 %v101
    %v150 = vunpack.c.l.b16 %v102
    %v151 = vunpack.c.l.b16 %v103
    %v152 = vunpack.c.l.b16 %v104
    %v153 = vunpack.c.l.b16 %v105
    %v154 = vunpack.c.l.b16 %v106
    %v155 = vunpack.c.l.b16 %v107
    %v156 = vunpack.c.l.b16 %v108
    %v157 = vunpack.c.l.b16 %v109
    %v158 = vunpack.c.l.b16 %v110
    %v159 = vunpack.c.l.b16 %v111
    %v160 = vunpack.c.l.b16 %v112
    %v161 = vunpack.c.l.b16 %v113
    %v162 = vunpack.c.l.b16 %v114
    %v163 = vpack.c.b16 %v148, %v147
    %v164 = vpack.c.b16 %v150, %v149
    %v165 = vpack.c.b16 %v152, %v151
    %v166 = vpack.c.b16 %v154, %v153
    %v167 = vpack.c.b16 %v156, %v155
    %v168 = vpack.c.b16 %v158, %v157
    %v169 = vpack.c.b16 %v160, %v159
    %v170 = vpack.c.b16 %v162, %v161
    %v195 = vunpack.c.l.b16 %v115
    %v196 = vunpack.c.l.b16 %v116
    %v197 = vunpack.c.l.b16 %v117
    %v198 = vunpack.c.l.b16 %v118
    %v199 = vunpack.c.l.b16 %v119
    %v200 = vunpack.c.l.b16 %v120
    %v201 = vunpack.c.l.b16 %v121
    %v202 = vunpack.c.l.b16 %v122
    %v203 = vunpack.c.l.b16 %v123
    %v204 = vunpack.c.l.b16 %v124
    %v205 = vunpack.c.l.b16 %v125
    %v206 = vunpack.c.l.b16 %v126
    %v207 = vunpack.c.l.b16 %v127
    %v208 = vunpack.c.l.b16 %v128
    %v209 = vunpack.c.l.b16 %v129
    %v210 = vunpack.c.l.b16 %v130
    %v211 = vpack.c.b16 %v196, %v195
    %v212 = vpack.c.b16 %v198, %v197
    %v213 = vpack.c.b16 %v200, %v199
    %v214 = vpack.c.b16 %v202, %v201
    %v215 = vpack.c.b16 %v204, %v203
    %v216 = vpack.c.b16 %v206, %v205
    %v217 = vpack.c.b16 %v208, %v207
    %v218 = vpack.c.b16 %v210, %v209
    %227 = vmatprep.subr.bf16.mxu0 0
    %228 = vmatpush1.bf16.msra.mxu0 %v218
    %229 = vmatprep.subr.bf16.mxu0 0
    %230 = vmatpush1.bf16.msra.mxu0 %v217
    %231 = vmatprep.subr.bf16.mxu0 0
    %232 = vmatpush1.bf16.msra.mxu0 %v216
    %233 = vmatprep.subr.bf16.mxu0 0
    %234 = vmatpush1.bf16.msra.mxu0 %v215
    %235 = vmatprep.subr.bf16.mxu0 0
    %236 = vmatpush1.bf16.msra.mxu0 %v214
    %237 = vmatprep.subr.bf16.mxu0 0
    %238 = vmatpush1.bf16.msra.mxu0 %v213
    %239 = vmatprep.subr.bf16.mxu0 0
    %240 = vmatpush1.bf16.msra.mxu0 %v212
    %241 = vmatprep.subr.bf16.mxu0 0
    %242 = vmatpush1.bf16.msra.mxu0 %v211
    %243 = vmatprep.subr.bf16.mxu0 0
    %244 = vmatpush2.bf16.msra.mxu0 0
    %245 = vmatprep.subr.bf16.mxu0 0
    %246 = vmatpush2.bf16.msra.mxu0 0
    %247 = vmatprep.subr.bf16.mxu0 0
    %248 = vmatpush2.bf16.msra.mxu0 0
    %249 = vmatprep.subr.bf16.mxu0 0
    %250 = vmatpush2.bf16.msra.mxu0 0
    %251 = vmatprep.subr.bf16.mxu0 0
    %252 = vmatpush2.bf16.msra.mxu0 0
    %253 = vmatprep.subr.bf16.mxu0 0
    %254 = vmatpush2.bf16.msra.mxu0 0
    %255 = vmatprep.subr.bf16.mxu0 0
    %256 = vmatpush2.bf16.msra.mxu0 0
    %257 = vmatprep.subr.bf16.mxu0 0
    %258 = vmatpush2.bf16.msra.mxu0 0
    %259 = vmatprep.mubr.bf16.mxu0 0
    %260 = vmatmul.mubr.bf16.gmra.mxu0 %v163
    %v261 = vpop.f32.mrf.mxu0
    %v262 = vadd.f32 0.0, %v261
    %v263 = vpop.f32.mrf.mxu0
    %v264 = vpop.f32.mrf.mxu0
    %v265 = vadd.f32 0.0, %v264
    %v266 = vpop.f32.mrf.mxu0
    %267 = vmatprep.mubr.bf16.mxu0 0
    %268 = vmatmul.mubr.bf16.gmra.mxu0 %v164
    %v269 = vpop.f32.mrf.mxu0
    %v270 = vadd.f32 0.0, %v269
    %v271 = vpop.f32.mrf.mxu0
    %v272 = vpop.f32.mrf.mxu0
    %v273 = vadd.f32 0.0, %v272
    %v274 = vpop.f32.mrf.mxu0
    %275 = vmatprep.mubr.bf16.mxu0 0
    %276 = vmatmul.mubr.bf16.gmra.mxu0 %v165
    %v277 = vpop.f32.mrf.mxu0
    %v278 = vadd.f32 0.0, %v277
    %v279 = vpop.f32.mrf.mxu0
    %v280 = vpop.f32.mrf.mxu0
    %v281 = vadd.f32 0.0, %v280
    %v282 = vpop.f32.mrf.mxu0
    %283 = vmatprep.mubr.bf16.mxu0 0
    %284 = vmatmul.mubr.bf16.gmra.mxu0 %v166
    %v285 = vpop.f32.mrf.mxu0
    %v286 = vadd.f32 0.0, %v285
    %v287 = vpop.f32.mrf.mxu0
    %v288 = vpop.f32.mrf.mxu0
    %v289 = vadd.f32 0.0, %v288
    %v290 = vpop.f32.mrf.mxu0
    %291 = vmatprep.mubr.bf16.mxu0 0
    %292 = vmatmul.mubr.bf16.gmra.mxu0 %v167
    %v293 = vpop.f32.mrf.mxu0
    %v294 = vadd.f32 0.0, %v293
    %v295 = vpop.f32.mrf.mxu0
    %v296 = vpop.f32.mrf.mxu0
    %v297 = vadd.f32 0.0, %v296
    %v298 = vpop.f32.mrf.mxu0
    %299 = vmatprep.mubr.bf16.mxu0 0
    %300 = vmatmul.mubr.bf16.gmra.mxu0 %v168
    %v301 = vpop.f32.mrf.mxu0
    %v302 = vadd.f32 0.0, %v301
    %v303 = vpop.f32.mrf.mxu0
    %v304 = vpop.f32.mrf.mxu0
    %v305 = vadd.f32 0.0, %v304
    %v306 = vpop.f32.mrf.mxu0
    %307 = vmatprep.mubr.bf16.mxu0 0
    %308 = vmatmul.mubr.bf16.gmra.mxu0 %v169
    %v309 = vpop.f32.mrf.mxu0
    %v310 = vadd.f32 0.0, %v309
    %v311 = vpop.f32.mrf.mxu0
    %v312 = vpop.f32.mrf.mxu0
    %v313 = vadd.f32 0.0, %v312
    %v314 = vpop.f32.mrf.mxu0
    %315 = vmatprep.mubr.bf16.mxu0 0
    %316 = vmatmul.mubr.bf16.gmra.mxu0 %v170
    %v317 = vpop.f32.mrf.mxu0
    %v318 = vadd.f32 0.0, %v317
    %v319 = vpop.f32.mrf.mxu0
    %v320 = vpop.f32.mrf.mxu0
    %v321 = vadd.f32 0.0, %v320
    %v322 = vpop.f32.mrf.mxu0
    %323 = vdwg.mxu0
    %v324 = vpack.c.bf16 %v265, %v262
    %v325 = vpack.c.bf16 %v273, %v270
    %v326 = vpack.c.bf16 %v281, %v278
    %v327 = vpack.c.bf16 %v289, %v286
    %v328 = vpack.c.bf16 %v297, %v294
    %v329 = vpack.c.bf16 %v305, %v302
    %v330 = vpack.c.bf16 %v313, %v310
    %v331 = vpack.c.bf16 %v321, %v318
    %v332 = vld [vmem:[%s3] sm:$0x1]
    %v334 = vlaneseq
    %v335 = vshrl.u32 %v334, 7
    %v336 = vsub.s32 0, %v335
    %v337 = vrot.slane %v332, %v336
    %v355 = vunpack.c.l.b16 %v83
    %v356 = vunpack.c.l.b16 %v84
    %v357 = vunpack.c.l.b16 %v85
    %v358 = vunpack.c.l.b16 %v86
    %v359 = vunpack.c.l.b16 %v87
    %v360 = vunpack.c.l.b16 %v88
    %v361 = vunpack.c.l.b16 %v89
    %v362 = vunpack.c.l.b16 %v90
    %v363 = vunpack.c.l.b16 %v91
    %v364 = vunpack.c.l.b16 %v92
    %v365 = vunpack.c.l.b16 %v93
    %v366 = vunpack.c.l.b16 %v94
    %v367 = vunpack.c.l.b16 %v95
    %v368 = vunpack.c.l.b16 %v96
    %v369 = vunpack.c.l.b16 %v97
    %v370 = vunpack.c.l.b16 %v98
    %v371 = vpack.c.b16 %v356, %v355
    %v372 = vpack.c.b16 %v358, %v357
    %v373 = vpack.c.b16 %v360, %v359
    %v374 = vpack.c.b16 %v362, %v361
    %v375 = vpack.c.b16 %v364, %v363
    %v376 = vpack.c.b16 %v366, %v365
    %v377 = vpack.c.b16 %v368, %v367
    %v378 = vpack.c.b16 %v370, %v369
    %387 = vmatprep.subr.bf16.mxu0 0
    %388 = vmatpush1.bf16.msra.mxu0 %v331
    %389 = vmatprep.subr.bf16.mxu0 0
    %390 = vmatpush1.bf16.msra.mxu0 %v330
    %391 = vmatprep.subr.bf16.mxu0 0
    %392 = vmatpush1.bf16.msra.mxu0 %v329
    %393 = vmatprep.subr.bf16.mxu0 0
    %394 = vmatpush1.bf16.msra.mxu0 %v328
    %395 = vmatprep.subr.bf16.mxu0 0
    %396 = vmatpush1.bf16.msra.mxu0 %v327
    %397 = vmatprep.subr.bf16.mxu0 0
    %398 = vmatpush1.bf16.msra.mxu0 %v326
    %399 = vmatprep.subr.bf16.mxu0 0
    %400 = vmatpush1.bf16.msra.mxu0 %v325
    %401 = vmatprep.subr.bf16.mxu0 0
    %402 = vmatpush1.bf16.msra.mxu0 %v324
    %403 = vmatprep.subr.bf16.mxu0 0
    %404 = vmatpush2.bf16.msra.mxu0 0
    %405 = vmatprep.subr.bf16.mxu0 0
    %406 = vmatpush2.bf16.msra.mxu0 0
    %407 = vmatprep.subr.bf16.mxu0 0
    %408 = vmatpush2.bf16.msra.mxu0 0
    %409 = vmatprep.subr.bf16.mxu0 0
    %410 = vmatpush2.bf16.msra.mxu0 0
    %411 = vmatprep.subr.bf16.mxu0 0
    %412 = vmatpush2.bf16.msra.mxu0 0
    %413 = vmatprep.subr.bf16.mxu0 0
    %414 = vmatpush2.bf16.msra.mxu0 0
    %415 = vmatprep.subr.bf16.mxu0 0
    %416 = vmatpush2.bf16.msra.mxu0 0
    %417 = vmatprep.subr.bf16.mxu0 0
    %418 = vmatpush2.bf16.msra.mxu0 0
    %419 = vmatprep.mubr.bf16.mxu0 0
    %420 = vmatmul.mubr.bf16.gmra.mxu0 %v371
    %v421 = vpop.f32.mrf.mxu0
    %v422 = vadd.f32 %v337, %v421
    %v423 = vpop.f32.mrf.mxu0
    %v424 = vpop.f32.mrf.mxu0
    %v425 = vadd.f32 %v337, %v424
    %v426 = vpop.f32.mrf.mxu0
    %427 = vmatprep.mubr.bf16.mxu0 0
    %428 = vmatmul.mubr.bf16.gmra.mxu0 %v372
    %v429 = vpop.f32.mrf.mxu0
    %v430 = vadd.f32 %v337, %v429
    %v431 = vpop.f32.mrf.mxu0
    %v432 = vpop.f32.mrf.mxu0
    %v433 = vadd.f32 %v337, %v432
    %v434 = vpop.f32.mrf.mxu0
    %435 = vmatprep.mubr.bf16.mxu0 0
    %436 = vmatmul.mubr.bf16.gmra.mxu0 %v373
    %v437 = vpop.f32.mrf.mxu0
    %v438 = vadd.f32 %v337, %v437
    %v439 = vpop.f32.mrf.mxu0
    %v440 = vpop.f32.mrf.mxu0
    %v441 = vadd.f32 %v337, %v440
    %v442 = vpop.f32.mrf.mxu0
    %443 = vmatprep.mubr.bf16.mxu0 0
    %444 = vmatmul.mubr.bf16.gmra.mxu0 %v374
    %v445 = vpop.f32.mrf.mxu0
    %v446 = vadd.f32 %v337, %v445
    %v447 = vpop.f32.mrf.mxu0
    %v448 = vpop.f32.mrf.mxu0
    %v449 = vadd.f32 %v337, %v448
    %v450 = vpop.f32.mrf.mxu0
    %451 = vmatprep.mubr.bf16.mxu0 0
    %452 = vmatmul.mubr.bf16.gmra.mxu0 %v375
    %v453 = vpop.f32.mrf.mxu0
    %v454 = vadd.f32 %v337, %v453
    %v455 = vpop.f32.mrf.mxu0
    %v456 = vpop.f32.mrf.mxu0
    %v457 = vadd.f32 %v337, %v456
    %v458 = vpop.f32.mrf.mxu0
    %459 = vmatprep.mubr.bf16.mxu0 0
    %460 = vmatmul.mubr.bf16.gmra.mxu0 %v376
    %v461 = vpop.f32.mrf.mxu0
    %v462 = vadd.f32 %v337, %v461
    %v463 = vpop.f32.mrf.mxu0
    %v464 = vpop.f32.mrf.mxu0
    %v465 = vadd.f32 %v337, %v464
    %v466 = vpop.f32.mrf.mxu0
    %467 = vmatprep.mubr.bf16.mxu0 0
    %468 = vmatmul.mubr.bf16.gmra.mxu0 %v377
    %v469 = vpop.f32.mrf.mxu0
    %v470 = vadd.f32 %v337, %v469
    %v471 = vpop.f32.mrf.mxu0
    %v472 = vpop.f32.mrf.mxu0
    %v473 = vadd.f32 %v337, %v472
    %v474 = vpop.f32.mrf.mxu0
    %475 = vmatprep.mubr.bf16.mxu0 0
    %476 = vmatmul.mubr.bf16.gmra.mxu0 %v378
    %v477 = vpop.f32.mrf.mxu0
    %v478 = vadd.f32 %v337, %v477
    %v479 = vpop.f32.mrf.mxu0
    %v480 = vpop.f32.mrf.mxu0
    %v481 = vadd.f32 %v337, %v480
    %v482 = vpop.f32.mrf.mxu0
    %483 = vdwg.mxu0
    %v484 = vmax.f32 %v422, 0.0
    %v485 = vmax.f32 %v425, 0.0
    %v486 = vmax.f32 %v430, 0.0
    %v487 = vmax.f32 %v433, 0.0
    %v488 = vmax.f32 %v438, 0.0
    %v489 = vmax.f32 %v441, 0.0
    %v490 = vmax.f32 %v446, 0.0
    %v491 = vmax.f32 %v449, 0.0
    %v492 = vmax.f32 %v454, 0.0
    %v493 = vmax.f32 %v457, 0.0
    %v494 = vmax.f32 %v462, 0.0
    %v495 = vmax.f32 %v465, 0.0
    %v496 = vmax.f32 %v470, 0.0
    %v497 = vmax.f32 %v473, 0.0
    %v498 = vmax.f32 %v478, 0.0
    %v499 = vmax.f32 %v481, 0.0
    %500 = vst [vmem:[#allocation11] sm:$0xff] %v484
    %501 = vst [vmem:[#allocation11 + $0x8] sm:$0xff] %v485
    %502 = vst [vmem:[#allocation11 + $0x10] sm:$0xff] %v486
    %503 = vst [vmem:[#allocation11 + $0x18] sm:$0xff] %v487
    %504 = vst [vmem:[#allocation11 + $0x20] sm:$0xff] %v488
    %505 = vst [vmem:[#allocation11 + $0x28] sm:$0xff] %v489
    %506 = vst [vmem:[#allocation11 + $0x30] sm:$0xff] %v490
    %507 = vst [vmem:[#allocation11 + $0x38] sm:$0xff] %v491
    %508 = vst [vmem:[#allocation11 + $0x40] sm:$0xff] %v492
    %509 = vst [vmem:[#allocation11 + $0x48] sm:$0xff] %v493
    %510 = vst [vmem:[#allocation11 + $0x50] sm:$0xff] %v494
    %511 = vst [vmem:[#allocation11 + $0x58] sm:$0xff] %v495
    %512 = vst [vmem:[#allocation11 + $0x60] sm:$0xff] %v496
    %513 = vst [vmem:[#allocation11 + $0x68] sm:$0xff] %v497
    %514 = vst [vmem:[#allocation11 + $0x70] sm:$0xff] %v498
    %515 = vst [vmem:[#allocation11 + $0x78] sm:$0xff] %v499
    %v516 = vpack.c.bf16 %v485, %v484
    %v517 = vpack.c.bf16 %v487, %v486
    %v518 = vpack.c.bf16 %v489, %v488
    %v519 = vpack.c.bf16 %v491, %v490
    %v520 = vpack.c.bf16 %v493, %v492
    %v521 = vpack.c.bf16 %v495, %v494
    %v522 = vpack.c.bf16 %v497, %v496
    %v523 = vpack.c.bf16 %v499, %v498
    %v524 = vld [vmem:[#allocation8] sm:$0xf]
    %v525 = vld [vmem:[#allocation8 + $0x4] sm:$0xf]
    %v526 = vld [vmem:[#allocation8 + $0x8] sm:$0xf]
    %v527 = vld [vmem:[#allocation8 + $0xc] sm:$0xf]
    %v528 = vld [vmem:[#allocation8 + $0x10] sm:$0xf]
    %v529 = vld [vmem:[#allocation8 + $0x14] sm:$0xf]
    %v530 = vld [vmem:[#allocation8 + $0x18] sm:$0xf]
    %v531 = vld [vmem:[#allocation8 + $0x1c] sm:$0xf]
    %v532 = vld [vmem:[#allocation8 + $0x20] sm:$0xf]
    %v533 = vld [vmem:[#allocation8 + $0x24] sm:$0xf]
    %v534 = vld [vmem:[#allocation8 + $0x28] sm:$0xf]
    %v535 = vld [vmem:[#allocation8 + $0x2c] sm:$0xf]
    %v536 = vld [vmem:[#allocation8 + $0x30] sm:$0xf]
    %v537 = vld [vmem:[#allocation8 + $0x34] sm:$0xf]
    %v538 = vld [vmem:[#allocation8 + $0x38] sm:$0xf]
    %v539 = vld [vmem:[#allocation8 + $0x3c] sm:$0xf]
    %v556 = vunpack.c.l.b16 %v524
    %v557 = vunpack.c.l.b16 %v525
    %v558 = vunpack.c.l.b16 %v526
    %v559 = vunpack.c.l.b16 %v527
    %v560 = vunpack.c.l.b16 %v528
    %v561 = vunpack.c.l.b16 %v529
    %v562 = vunpack.c.l.b16 %v530
    %v563 = vunpack.c.l.b16 %v531
    %v564 = vunpack.c.l.b16 %v532
    %v565 = vunpack.c.l.b16 %v533
    %v566 = vunpack.c.l.b16 %v534
    %v567 = vunpack.c.l.b16 %v535
    %v568 = vunpack.c.l.b16 %v536
    %v569 = vunpack.c.l.b16 %v537
    %v570 = vunpack.c.l.b16 %v538
    %v571 = vunpack.c.l.b16 %v539
    %v572 = vpack.c.b16 %v557, %v556
    %v573 = vpack.c.b16 %v559, %v558
    %v574 = vpack.c.b16 %v561, %v560
    %v575 = vpack.c.b16 %v563, %v562
    %v576 = vpack.c.b16 %v565, %v564
    %v577 = vpack.c.b16 %v567, %v566
    %v578 = vpack.c.b16 %v569, %v568
    %v579 = vpack.c.b16 %v571, %v570
    %588 = vmatprep.subr.bf16.mxu0 0
    %589 = vmatpush1.bf16.msra.mxu0 %v579
    %590 = vmatprep.subr.bf16.mxu0 0
    %591 = vmatpush1.bf16.msra.mxu0 %v578
    %592 = vmatprep.subr.bf16.mxu0 0
    %593 = vmatpush1.bf16.msra.mxu0 %v577
    %594 = vmatprep.subr.bf16.mxu0 0
    %595 = vmatpush1.bf16.msra.mxu0 %v576
    %596 = vmatprep.subr.bf16.mxu0 0
    %597 = vmatpush1.bf16.msra.mxu0 %v575
    %598 = vmatprep.subr.bf16.mxu0 0
    %599 = vmatpush1.bf16.msra.mxu0 %v574
    %600 = vmatprep.subr.bf16.mxu0 0
    %601 = vmatpush1.bf16.msra.mxu0 %v573
    %602 = vmatprep.subr.bf16.mxu0 0
    %603 = vmatpush1.bf16.msra.mxu0 %v572
    %604 = vmatprep.subr.bf16.mxu0 0
    %605 = vmatpush2.bf16.msra.mxu0 0
    %606 = vmatprep.subr.bf16.mxu0 0
    %607 = vmatpush2.bf16.msra.mxu0 0
    %608 = vmatprep.subr.bf16.mxu0 0
    %609 = vmatpush2.bf16.msra.mxu0 0
    %610 = vmatprep.subr.bf16.mxu0 0
    %611 = vmatpush2.bf16.msra.mxu0 0
    %612 = vmatprep.subr.bf16.mxu0 0
    %613 = vmatpush2.bf16.msra.mxu0 0
    %614 = vmatprep.subr.bf16.mxu0 0
    %615 = vmatpush2.bf16.msra.mxu0 0
    %616 = vmatprep.subr.bf16.mxu0 0
    %617 = vmatpush2.bf16.msra.mxu0 0
    %618 = vmatprep.subr.bf16.mxu0 0
    %619 = vmatpush2.bf16.msra.mxu0 0
    %620 = vmatprep.mubr.bf16.mxu0 0
    %621 = vmatmul.mubr.bf16.gmra.mxu0 %v516
    %v622 = vpop.f32.mrf.mxu0
    %v623 = vadd.f32 0.0, %v622
    %v624 = vpop.f32.mrf.mxu0
    %v625 = vpop.f32.mrf.mxu0
    %v626 = vadd.f32 0.0, %v625
    %v627 = vpop.f32.mrf.mxu0
    %628 = vmatprep.mubr.bf16.mxu0 0
    %629 = vmatmul.mubr.bf16.gmra.mxu0 %v517
    %v630 = vpop.f32.mrf.mxu0
    %v631 = vadd.f32 0.0, %v630
    %v632 = vpop.f32.mrf.mxu0
    %v633 = vpop.f32.mrf.mxu0
    %v634 = vadd.f32 0.0, %v633
    %v635 = vpop.f32.mrf.mxu0
    %636 = vmatprep.mubr.bf16.mxu0 0
    %637 = vmatmul.mubr.bf16.gmra.mxu0 %v518
    %v638 = vpop.f32.mrf.mxu0
    %v639 = vadd.f32 0.0, %v638
    %v640 = vpop.f32.mrf.mxu0
    %v641 = vpop.f32.mrf.mxu0
    %v642 = vadd.f32 0.0, %v641
    %v643 = vpop.f32.mrf.mxu0
    %644 = vmatprep.mubr.bf16.mxu0 0
    %645 = vmatmul.mubr.bf16.gmra.mxu0 %v519
    %v646 = vpop.f32.mrf.mxu0
    %v647 = vadd.f32 0.0, %v646
    %v648 = vpop.f32.mrf.mxu0
    %v649 = vpop.f32.mrf.mxu0
    %v650 = vadd.f32 0.0, %v649
    %v651 = vpop.f32.mrf.mxu0
    %652 = vmatprep.mubr.bf16.mxu0 0
    %653 = vmatmul.mubr.bf16.gmra.mxu0 %v520
    %v654 = vpop.f32.mrf.mxu0
    %v655 = vadd.f32 0.0, %v654
    %v656 = vpop.f32.mrf.mxu0
    %v657 = vpop.f32.mrf.mxu0
    %v658 = vadd.f32 0.0, %v657
    %v659 = vpop.f32.mrf.mxu0
    %660 = vmatprep.mubr.bf16.mxu0 0
    %661 = vmatmul.mubr.bf16.gmra.mxu0 %v521
    %v662 = vpop.f32.mrf.mxu0
    %v663 = vadd.f32 0.0, %v662
    %v664 = vpop.f32.mrf.mxu0
    %v665 = vpop.f32.mrf.mxu0
    %v666 = vadd.f32 0.0, %v665
    %v667 = vpop.f32.mrf.mxu0
    %668 = vmatprep.mubr.bf16.mxu0 0
    %669 = vmatmul.mubr.bf16.gmra.mxu0 %v522
    %v670 = vpop.f32.mrf.mxu0
    %v671 = vadd.f32 0.0, %v670
    %v672 = vpop.f32.mrf.mxu0
    %v673 = vpop.f32.mrf.mxu0
    %v674 = vadd.f32 0.0, %v673
    %v675 = vpop.f32.mrf.mxu0
    %676 = vmatprep.mubr.bf16.mxu0 0
    %677 = vmatmul.mubr.bf16.gmra.mxu0 %v523
    %v678 = vpop.f32.mrf.mxu0
    %v679 = vadd.f32 0.0, %v678
    %v680 = vpop.f32.mrf.mxu0
    %v681 = vpop.f32.mrf.mxu0
    %v682 = vadd.f32 0.0, %v681
    %v683 = vpop.f32.mrf.mxu0
    %684 = vdwg.mxu0
    %v685 = vpack.c.bf16 %v626, %v623
    %v686 = vpack.c.bf16 %v634, %v631
    %v687 = vpack.c.bf16 %v642, %v639
    %v688 = vpack.c.bf16 %v650, %v647
    %v689 = vpack.c.bf16 %v658, %v655
    %v690 = vpack.c.bf16 %v666, %v663
    %v691 = vpack.c.bf16 %v674, %v671
    %v692 = vpack.c.bf16 %v682, %v679
    %v693 = vld [vmem:[%s5] sm:$0x1]
    %v695 = vlaneseq
    %v696 = vshrl.u32 %v695, 7
    %v697 = vsub.s32 0, %v696
    %v698 = vrot.slane %v693, %v697
    %700 = vmatprep.subr.bf16.mxu0 0
    %701 = vmatpush1.bf16.msra.mxu0 %v692
    %702 = vmatprep.subr.bf16.mxu0 0
    %703 = vmatpush1.bf16.msra.mxu0 %v691
    %704 = vmatprep.subr.bf16.mxu0 0
    %705 = vmatpush1.bf16.msra.mxu0 %v690
    %706 = vmatprep.subr.bf16.mxu0 0
    %707 = vmatpush1.bf16.msra.mxu0 %v689
    %708 = vmatprep.subr.bf16.mxu0 0
    %709 = vmatpush1.bf16.msra.mxu0 %v688
    %710 = vmatprep.subr.bf16.mxu0 0
    %711 = vmatpush1.bf16.msra.mxu0 %v687
    %712 = vmatprep.subr.bf16.mxu0 0
    %713 = vmatpush1.bf16.msra.mxu0 %v686
    %714 = vmatprep.subr.bf16.mxu0 0
    %715 = vmatpush1.bf16.msra.mxu0 %v685
    %716 = vmatprep.subr.bf16.mxu0 0
    %717 = vmatpush2.bf16.msra.mxu0 0
    %718 = vmatprep.subr.bf16.mxu0 0
    %719 = vmatpush2.bf16.msra.mxu0 0
    %720 = vmatprep.subr.bf16.mxu0 0
    %721 = vmatpush2.bf16.msra.mxu0 0
    %722 = vmatprep.subr.bf16.mxu0 0
    %723 = vmatpush2.bf16.msra.mxu0 0
    %724 = vmatprep.subr.bf16.mxu0 0
    %725 = vmatpush2.bf16.msra.mxu0 0
    %726 = vmatprep.subr.bf16.mxu0 0
    %727 = vmatpush2.bf16.msra.mxu0 0
    %728 = vmatprep.subr.bf16.mxu0 0
    %729 = vmatpush2.bf16.msra.mxu0 0
    %730 = vmatprep.subr.bf16.mxu0 0
    %731 = vmatpush2.bf16.msra.mxu0 0
    %732 = vmatprep.mubr.bf16.mxu0 0
    %733 = vmatmul.mubr.bf16.gmra.mxu0 %v371
    %v734 = vpop.f32.mrf.mxu0
    %v735 = vadd.f32 %v698, %v734
    %v736 = vpop.f32.mrf.mxu0
    %v737 = vpop.f32.mrf.mxu0
    %v738 = vadd.f32 %v698, %v737
    %v739 = vpop.f32.mrf.mxu0
    %740 = vmatprep.mubr.bf16.mxu0 0
    %741 = vmatmul.mubr.bf16.gmra.mxu0 %v372
    %v742 = vpop.f32.mrf.mxu0
    %v743 = vadd.f32 %v698, %v742
    %v744 = vpop.f32.mrf.mxu0
    %v745 = vpop.f32.mrf.mxu0
    %v746 = vadd.f32 %v698, %v745
    %v747 = vpop.f32.mrf.mxu0
    %748 = vmatprep.mubr.bf16.mxu0 0
    %749 = vmatmul.mubr.bf16.gmra.mxu0 %v373
    %v750 = vpop.f32.mrf.mxu0
    %v751 = vadd.f32 %v698, %v750
    %v752 = vpop.f32.mrf.mxu0
    %v753 = vpop.f32.mrf.mxu0
    %v754 = vadd.f32 %v698, %v753
    %v755 = vpop.f32.mrf.mxu0
    %756 = vmatprep.mubr.bf16.mxu0 0
    %757 = vmatmul.mubr.bf16.gmra.mxu0 %v374
    %v758 = vpop.f32.mrf.mxu0
    %v759 = vadd.f32 %v698, %v758
    %v760 = vpop.f32.mrf.mxu0
    %v761 = vpop.f32.mrf.mxu0
    %v762 = vadd.f32 %v698, %v761
    %v763 = vpop.f32.mrf.mxu0
    %764 = vmatprep.mubr.bf16.mxu0 0
    %765 = vmatmul.mubr.bf16.gmra.mxu0 %v375
    %v766 = vpop.f32.mrf.mxu0
    %v767 = vadd.f32 %v698, %v766
    %v768 = vpop.f32.mrf.mxu0
    %v769 = vpop.f32.mrf.mxu0
    %v770 = vadd.f32 %v698, %v769
    %v771 = vpop.f32.mrf.mxu0
    %772 = vmatprep.mubr.bf16.mxu0 0
    %773 = vmatmul.mubr.bf16.gmra.mxu0 %v376
    %v774 = vpop.f32.mrf.mxu0
    %v775 = vadd.f32 %v698, %v774
    %v776 = vpop.f32.mrf.mxu0
    %v777 = vpop.f32.mrf.mxu0
    %v778 = vadd.f32 %v698, %v777
    %v779 = vpop.f32.mrf.mxu0
    %780 = vmatprep.mubr.bf16.mxu0 0
    %781 = vmatmul.mubr.bf16.gmra.mxu0 %v377
    %v782 = vpop.f32.mrf.mxu0
    %v783 = vadd.f32 %v698, %v782
    %v784 = vpop.f32.mrf.mxu0
    %v785 = vpop.f32.mrf.mxu0
    %v786 = vadd.f32 %v698, %v785
    %v787 = vpop.f32.mrf.mxu0
    %788 = vmatprep.mubr.bf16.mxu0 0
    %789 = vmatmul.mubr.bf16.gmra.mxu0 %v378
    %v790 = vpop.f32.mrf.mxu0
    %v791 = vadd.f32 %v698, %v790
    %v792 = vpop.f32.mrf.mxu0
    %v793 = vpop.f32.mrf.mxu0
    %v794 = vadd.f32 %v698, %v793
    %v795 = vpop.f32.mrf.mxu0
    %796 = vdwg.mxu0
    %797 = vst [vmem:[#allocation10] sm:$0xff] %v735
    %798 = vst [vmem:[#allocation10 + $0x8] sm:$0xff] %v738
    %799 = vst [vmem:[#allocation10 + $0x10] sm:$0xff] %v743
    %800 = vst [vmem:[#allocation10 + $0x18] sm:$0xff] %v746
    %801 = vst [vmem:[#allocation10 + $0x20] sm:$0xff] %v751
    %802 = vst [vmem:[#allocation10 + $0x28] sm:$0xff] %v754
    %803 = vst [vmem:[#allocation10 + $0x30] sm:$0xff] %v759
    %804 = vst [vmem:[#allocation10 + $0x38] sm:$0xff] %v762
    %805 = vst [vmem:[#allocation10 + $0x40] sm:$0xff] %v767
    %806 = vst [vmem:[#allocation10 + $0x48] sm:$0xff] %v770
    %807 = vst [vmem:[#allocation10 + $0x50] sm:$0xff] %v775
    %808 = vst [vmem:[#allocation10 + $0x58] sm:$0xff] %v778
    %809 = vst [vmem:[#allocation10 + $0x60] sm:$0xff] %v783
    %810 = vst [vmem:[#allocation10 + $0x68] sm:$0xff] %v786
    %811 = vst [vmem:[#allocation10 + $0x70] sm:$0xff] %v791
    %812 = vst [vmem:[#allocation10 + $0x78] sm:$0xff] %v794
    // Predicated region
    $region42: #{tpu_custom_call.1} parent=1 // pred_check
      _
    $region43: #{tpu_custom_call.1} parent=1 // pred_check_branch
      %814 = sbr.rel (0) target = $region45
    $region44: #{tpu_custom_call.1} parent=1 // pred_region
      %s816 = ssub.s32 2048, 2048
      %817 = vsyncadd [#allocation4], %s816
      %s818 = sshll.u32 [#allocation10], 4
      %s819 = int_to_ptr.vmem [resolvable:$true] %s818
      %824 = dma.vmem_to_hbm [thread:$0]  %s819, 2048, %s6, [#allocation4], 128, 128, 8
    $region45: #{tpu_custom_call.1} parent=1 // pred_fallthru
      _
    // Predicated region
    $region46: #{tpu_custom_call.1} parent=1 // pred_check
      _
    $region47: #{tpu_custom_call.1} parent=1 // pred_check_branch
      %826 = sbr.rel (0) target = $region49
    $region48: #{tpu_custom_call.1} parent=1 // pred_region
      %s828 = ssub.s32 2048, 2048
      %829 = vsyncadd [#allocation12], %s828
      %s830 = sshll.u32 [#allocation11], 4
      %s831 = int_to_ptr.vmem [resolvable:$true] %s830
      %836 = dma.vmem_to_hbm [thread:$0]  %s831, 2048, %s7, [#allocation12], 128, 128, 8
    $region49: #{tpu_custom_call.1} parent=1 // pred_fallthru
      _
    // Predicated region
    $region50: #{tpu_custom_call.1} parent=1 // pred_check
      _
    $region51: #{tpu_custom_call.1} parent=1 // pred_check_branch
      %838 = sbr.rel (0) target = $region53
    $region52: #{tpu_custom_call.1} parent=1 // pred_region
      %839 = dma.done [#allocation4], 2048
    $region53: #{tpu_custom_call.1} parent=1 // pred_fallthru
      _
    // Predicated region
    $region54: #{tpu_custom_call.1} parent=1 // pred_check
      _
    $region55: #{tpu_custom_call.1} parent=1 // pred_check_branch
      %841 = sbr.rel (0) target = $region57
    $region56: #{tpu_custom_call.1} parent=1 // pred_region
      %842 = dma.done [#allocation12], 2048
    $region57: #{tpu_custom_call.1} parent=1 // pred_fallthru
      _
    %843 = vsyncpa [#allocation3], 1
    %844 = vsyncpa [#allocation6], 1
    %845 = vsyncpa [#allocation9], 1
    %846 = vsyncpa [#allocation4], 1
    %847 = vsyncpa [#allocation12], 1

</llo_original>
